<compile_context>
chip_gen: v6e
topology: v6e:2x2x1
jax: 0.10.0
libtpu: 0.0.40
codegen_flags: <defaults>
</compile_context>

<pallas_src>
import functools

import jax
import jax.numpy as jnp
from jax.experimental import pallas as pl
from jax.experimental.pallas import tpu as pltpu


def _round_up(n, m):
    return ((n + m - 1) // m) * m


def _target_net_kernel(vec_ref, wconv_ref, bconv_ref, wlin_ref, blin_ref,
                       wfm_ref, bfm_ref, latent_ref, pred_ref, im2col_ref,
                       *, ks, pad, fm_k):
    TB, L, D = vec_ref.shape
    Kp = wconv_ref.shape[1]          # lane-padded kernel_count
    Op = wlin_ref.shape[1]           # lane-padded cnn_out_dim

    # ---- fused Conv1d "same" zero padding + im2col into VMEM scratch --------
    # im2col_ref is (TB, L, ks*D); column block t holds x[l + t - pad].
    # The boundary-zero regions never change and the scratch persists across
    # grid steps, so they are written only on the first step.
    if ks > 1:
        @pl.when(pl.program_id(0) == 0)
        def _init_conv_pad():
            for t in range(ks):
                o = t - pad
                lo, hi = max(0, -o), min(L, L - o)
                if lo > 0:                                   # left conv pad
                    im2col_ref[:, 0:lo, t * D:(t + 1) * D] = jnp.zeros(
                        (TB, lo, D), jnp.float32)
                if hi < L:                                   # right conv pad
                    im2col_ref[:, hi:L, t * D:(t + 1) * D] = jnp.zeros(
                        (TB, L - hi, D), jnp.float32)

    x = vec_ref[...].astype(jnp.float32)                     # one full-tile load
    for t in range(ks):                                      # ks is small & static
        o = t - pad
        lo, hi = max(0, -o), min(L, L - o)
        if hi > lo:
            im2col_ref[:, lo:hi, t * D:(t + 1) * D] = x[:, lo + o:hi + o, :]

    # ---- Conv1d(word_dim -> kernel_count) as a single MXU matmul ------------
    a = im2col_ref[...].reshape(TB * L, ks * D).astype(jnp.bfloat16)
    conv = jnp.dot(a, wconv_ref[...], preferred_element_type=jnp.float32)
    conv = jnp.maximum(conv + bconv_ref[...], 0.0)           # bias + ReLU (f32)

    # ---- MaxPool2d(kernel=(1, review_length)) == max over the seq axis ------
    pooled = jnp.max(conv.reshape(TB, L, Kp), axis=1)        # (TB, Kp)

    # ---- Linear(kernel_count -> cnn_out_dim) + Tanh --------------------------
    latent = jnp.tanh(jnp.dot(pooled, wlin_ref[...],
                              preferred_element_type=jnp.float32) + blin_ref[...])
    latent_ref[...] = latent             # padded columns are exactly tanh(0) = 0

    # ---- FactorizationMachine, fused into a single matmul -------------------
    # TODO(synk): Dropout(config.dropout_prob) is identity at inference; not modeled.
    xcat = jnp.concatenate([latent, latent * latent], axis=-1)      # (TB, 2*Op)
    z = jnp.dot(xcat, wfm_ref[...], preferred_element_type=jnp.float32)
    inter1 = z[:, 0:fm_k]                                    # x   @ v
    inter2 = z[:, fm_k:2 * fm_k]                             # x^2 @ v^2
    linear_part = z[:, 2 * fm_k:2 * fm_k + 1] + bfm_ref[...]
    pair = jnp.sum(inter1 * inter1 - inter2, axis=-1, keepdims=True)
    pred = linear_part + 0.5 * pair                          # (TB, 1)
    pred_ref[...] = jnp.broadcast_to(pred, pred_ref.shape)   # lane-dense store


def target_net_forward(reviews, params):
    """reviews: (B, L) int32 token ids.  Returns (cnn_latent (B, O), prediction (B, 1))."""
    word_emb = params["word_emb"]
    B, L = reviews.shape
    D = word_emb.shape[1]
    ks, _, K = params["wconv"].shape
    O = params["wlin"].shape[1]
    fm_k = params["v"].shape[1]
    pad = (ks - 1) // 2

    Kp = _round_up(K, 128)               # lane-dense conv channels
    Op = _round_up(O, 128)               # lane-dense cnn_out_dim
    FMC = _round_up(2 * fm_k + 1, 128)   # lane-dense fused-FM output columns

    # Batch tiling: target ~2048 im2col rows (TB*L) per grid step to amortize
    # the ~0.35us/step overhead, keep TB a multiple of 8 sublanes, then shrink
    # if the per-step VMEM footprint would get large.
    TB = max(8, min(128, _round_up(max(1, 2048 // max(L, 1)), 8)))
    TB = min(TB, _round_up(B, 8))

    def _vmem_bytes(tb):
        vec_b = 2 * tb * L * D * 2                    # bf16 input, double-buffered
        scratch_b = tb * L * ks * D * 4               # f32 im2col scratch
        out_b = 2 * 2 * tb * (Op + FMC) * 4           # f32 outputs, double-buffered
        return vec_b + scratch_b + out_b

    while TB > 8 and _vmem_bytes(TB) > 8 * 1024 * 1024:
        TB -= 8

    Bp = _round_up(B, TB)
    if Bp != B:
        reviews = jnp.pad(reviews, ((0, Bp - B), (0, 0)))    # pad rows use token 0

    # Embedding gather stays as XLA glue but lands directly in bf16, and the
    # conv zero-pad is fused into the kernel, so this (only large) activation
    # is written/read over HBM exactly once at half the bytes.
    # TODO(synk): fusing the gather itself would need a manual per-row DMA gather.
    vec = jnp.take(word_emb, reviews, axis=0).astype(jnp.bfloat16)   # (Bp, L, D)

    # Lane-dense (zero-padded to 128) weights; conv weight flattened for im2col.
    wconv = (jnp.zeros((ks * D, Kp), jnp.float32)
             .at[:, :K].set(params["wconv"].reshape(ks * D, K))
             .astype(jnp.bfloat16))
    bconv = jnp.zeros((1, Kp), jnp.float32).at[:, :K].set(params["bconv"])
    wlin = jnp.zeros((Kp, Op), jnp.float32).at[:K, :O].set(params["wlin"])
    blin = jnp.zeros((1, Op), jnp.float32).at[:, :O].set(params["blin"])
    # Combined FM weight against [x | x*x]: cols [0:k]=v, [k:2k]=v*v, [2k]=fm linear.
    v = params["v"]
    wfm = jnp.zeros((2 * Op, FMC), jnp.float32)
    wfm = wfm.at[:O, 0:fm_k].set(v)
    wfm = wfm.at[Op:Op + O, fm_k:2 * fm_k].set(v * v)
    wfm = wfm.at[:O, 2 * fm_k:2 * fm_k + 1].set(params["wfm"])
    bfm = params["bfm"]                                               # (1, 1)

    def full(shape):                      # small resident operand (same block every step)
        return pl.BlockSpec(shape, lambda i: (0,) * len(shape))

    kernel = functools.partial(_target_net_kernel, ks=ks, pad=pad, fm_k=fm_k)
    latent_pad, pred_pad = pl.pallas_call(
        kernel,
        out_shape=(jax.ShapeDtypeStruct((Bp, Op), jnp.float32),
                   jax.ShapeDtypeStruct((Bp, FMC), jnp.float32)),
        grid=(Bp // TB,),
        in_specs=[
            pl.BlockSpec((TB, L, D), lambda i: (i, 0, 0)),   # embedded reviews (bf16)
            full(wconv.shape), full(bconv.shape),
            full(wlin.shape), full(blin.shape),
            full(wfm.shape), full(bfm.shape),
        ],
        out_specs=(pl.BlockSpec((TB, Op), lambda i: (i, 0)),
                   pl.BlockSpec((TB, FMC), lambda i: (i, 0))),
        scratch_shapes=[pltpu.VMEM((TB, L, ks * D), jnp.float32)],    # im2col slab
        compiler_params=pltpu.CompilerParams(
            dimension_semantics=("parallel",),
            vmem_limit_bytes=32 * 1024 * 1024),
    )(vec, wconv, bconv, wlin, blin, wfm, bfm)

    return latent_pad[:B, :O], pred_pad[:B, :1]


def init_params(key, vocab_size, word_dim, kernel_count, kernel_size, cnn_out_dim):
    k0, k1, k2, k3 = jax.random.split(key, 4)
    return dict(
        word_emb=jax.random.normal(k0, (vocab_size, word_dim), jnp.float32) * 0.1,
        # PyTorch Conv1d weight is (K, D, ks); stored here as (ks, D, K) for im2col.
        wconv=jax.random.normal(k1, (kernel_size, word_dim, kernel_count), jnp.float32) * 0.05,
        bconv=jnp.zeros((1, kernel_count), jnp.float32),
        wlin=jax.random.normal(k2, (kernel_count, cnn_out_dim), jnp.float32) * 0.05,
        blin=jnp.zeros((1, cnn_out_dim), jnp.float32),
        v=jnp.full((cnn_out_dim, 8), 0.001, jnp.float32),              # FM interaction factors
        wfm=jax.random.normal(k3, (cnn_out_dim, 1), jnp.float32) * 0.001,
        bfm=jnp.zeros((1, 1), jnp.float32),
    )


def _reference_forward(reviews, params):
    """Pure-JAX f32 reference of the PyTorch forward (for a sanity check)."""
    vec = jnp.take(params["word_emb"], reviews, axis=0)                 # (B, L, D)
    ks = params["wconv"].shape[0]
    pad = (ks - 1) // 2
    L = reviews.shape[1]
    vp = jnp.pad(vec, ((0, 0), (pad, pad), (0, 0)))
    conv = sum(jnp.einsum("bld,dk->blk", vp[:, t:t + L, :], params["wconv"][t])
               for t in range(ks)) + params["bconv"]
    pooled = jnp.max(jnp.maximum(conv, 0.0), axis=1)
    latent = jnp.tanh(pooled @ params["wlin"] + params["blin"])
    lin = latent @ params["wfm"] + params["bfm"]
    i1 = latent @ params["v"]
    i2 = (latent ** 2) @ (params["v"] ** 2)
    pred = lin + 0.5 * jnp.sum(i1 ** 2 - i2, axis=1, keepdims=True)
    return latent, pred


if __name__ == "__main__":
    # Small config consistent with the module:
    B, L = 2, 16              # batch, review_length
    vocab, word_dim = 50, 32
    kernel_count, kernel_size, cnn_out_dim = 16, 3, 32

    key = jax.random.PRNGKey(0)
    kp, kr = jax.random.split(key)
    params = init_params(kp, vocab, word_dim, kernel_count, kernel_size, cnn_out_dim)
    reviews = jax.random.randint(kr, (B, L), 0, vocab, dtype=jnp.int32)

    fwd = jax.jit(functools.partial(target_net_forward, params=params))
    latent, pred = fwd(reviews)
    jax.block_until_ready((latent, pred))

    assert latent.shape == (B, cnn_out_dim), latent.shape
    assert pred.shape == (B, 1), pred.shape

    lat_ref, pred_ref = _reference_forward(reviews, params)
    assert jnp.allclose(latent, lat_ref, rtol=5e-2, atol=5e-3), "latent mismatch"
    assert jnp.allclose(pred, pred_ref, rtol=5e-2, atol=5e-3), "prediction mismatch"
    print("KERNEL_OK")
</pallas_src>

<mosaic_0001>
module attributes {stable_mosaic.version = 11 : i64} {
  func.func @_target_net_kernel(%arg0: i32, %arg1: memref<8x16x32xbf16, #tpu.memory_space<vmem>>, %arg2: memref<96x128xbf16, #tpu.memory_space<vmem>>, %arg3: memref<1x128xf32, #tpu.memory_space<vmem>>, %arg4: memref<128x128xf32, #tpu.memory_space<vmem>>, %arg5: memref<1x128xf32, #tpu.memory_space<vmem>>, %arg6: memref<256x128xf32, #tpu.memory_space<vmem>>, %arg7: memref<1x1xf32, #tpu.memory_space<vmem>>, %arg8: memref<8x128xf32, #tpu.memory_space<vmem>>, %arg9: memref<8x128xf32, #tpu.memory_space<vmem>>, %arg10: memref<8x16x96xf32, #tpu.memory_space<vmem>>) attributes {dimension_semantics = [#tpu.dimension_semantics<parallel>], iteration_bounds = array<i64: 1>, scalar_prefetch = 0 : i64, scratch_operands = 1 : i64, tpu.core_type = #tpu.core_type<tc>, window_params = [{transform_indices = @transform_0, window_bounds = array<i64: 8, 16, 32>}, {pipeline_mode = #tpu.pipeline_mode<synchronous>, transform_indices = @transform_1, window_bounds = array<i64: 96, 128>}, {pipeline_mode = #tpu.pipeline_mode<synchronous>, transform_indices = @transform_2, window_bounds = array<i64: 1, 128>}, {pipeline_mode = #tpu.pipeline_mode<synchronous>, transform_indices = @transform_3, window_bounds = array<i64: 128, 128>}, {pipeline_mode = #tpu.pipeline_mode<synchronous>, transform_indices = @transform_4, window_bounds = array<i64: 1, 128>}, {pipeline_mode = #tpu.pipeline_mode<synchronous>, transform_indices = @transform_5, window_bounds = array<i64: 256, 128>}, {pipeline_mode = #tpu.pipeline_mode<synchronous>, transform_indices = @transform_6, window_bounds = array<i64: 1, 1>}, {transform_indices = @transform_7, window_bounds = array<i64: 8, 128>}, {transform_indices = @transform_8, window_bounds = array<i64: 8, 128>}]} {
    %c0_i32 = arith.constant 0 : i32
    %0 = arith.cmpi eq, %arg0, %c0_i32 : i32
    %1 = arith.extui %0 : i1 to i32
    %c0_i32_0 = arith.constant 0 : i32
    %2 = arith.cmpi ne, %1, %c0_i32_0 : i32
    scf.if %2 {
      %cst_34 = arith.constant 0.000000e+00 : f32
      %49 = vector.broadcast %cst_34 : f32 to vector<8x1x32xf32>
      %c0_35 = arith.constant 0 : index
      %c0_36 = arith.constant 0 : index
      %c0_37 = arith.constant 0 : index
      %50 = vector.load %arg10[%c0_35, %c0_36, %c0_37] : memref<8x16x96xf32, #tpu.memory_space<vmem>>, vector<8x1x32xf32>
      tpu.vector_store %arg10[%c0_35, %c0_36, %c0_37], %49 {strides = array<i32>} : memref<8x16x96xf32, #tpu.memory_space<vmem>>, vector<8x1x32xf32>,
      %cst_38 = arith.constant 0.000000e+00 : f32
      %51 = vector.broadcast %cst_38 : f32 to vector<8x1x32xf32>
      %c0_39 = arith.constant 0 : index
      %c15 = arith.constant 15 : index
      %c64_40 = arith.constant 64 : index
      %52 = vector.load %arg10[%c0_39, %c15, %c64_40] : memref<8x16x96xf32, #tpu.memory_space<vmem>>, vector<8x1x32xf32>
      tpu.vector_store %arg10[%c0_39, %c15, %c64_40], %51 {strides = array<i32>} : memref<8x16x96xf32, #tpu.memory_space<vmem>>, vector<8x1x32xf32>,
    } else {
    }
    %c0 = arith.constant 0 : index
    %c0_1 = arith.constant 0 : index
    %c0_2 = arith.constant 0 : index
    %3 = vector.load %arg1[%c0, %c0_1, %c0_2] : memref<8x16x32xbf16, #tpu.memory_space<vmem>>, vector<8x16x32xbf16>
    %4 = arith.extf %3 : vector<8x16x32xbf16> to vector<8x16x32xf32>
    %5 = vector.extract_strided_slice %4 {offsets = [0, 0, 0], sizes = [8, 15, 32], strides = [1, 1, 1]} : vector<8x16x32xf32> to vector<8x15x32xf32>
    %c0_3 = arith.constant 0 : index
    %c1 = arith.constant 1 : index
    %c0_4 = arith.constant 0 : index
    %6 = vector.load %arg10[%c0_3, %c1, %c0_4] : memref<8x16x96xf32, #tpu.memory_space<vmem>>, vector<8x15x32xf32>
    tpu.vector_store %arg10[%c0_3, %c1, %c0_4], %5 {strides = array<i32>} : memref<8x16x96xf32, #tpu.memory_space<vmem>>, vector<8x15x32xf32>,
    %c0_5 = arith.constant 0 : index
    %c0_6 = arith.constant 0 : index
    %c32 = arith.constant 32 : index
    %7 = vector.load %arg10[%c0_5, %c0_6, %c32] : memref<8x16x96xf32, #tpu.memory_space<vmem>>, vector<8x16x32xf32>
    tpu.vector_store %arg10[%c0_5, %c0_6, %c32], %4 {strides = array<i32>} : memref<8x16x96xf32, #tpu.memory_space<vmem>>, vector<8x16x32xf32>,
    %8 = vector.extract_strided_slice %4 {offsets = [0, 1, 0], sizes = [8, 15, 32], strides = [1, 1, 1]} : vector<8x16x32xf32> to vector<8x15x32xf32>
    %c0_7 = arith.constant 0 : index
    %c0_8 = arith.constant 0 : index
    %c64 = arith.constant 64 : index
    %9 = vector.load %arg10[%c0_7, %c0_8, %c64] : memref<8x16x96xf32, #tpu.memory_space<vmem>>, vector<8x15x32xf32>
    tpu.vector_store %arg10[%c0_7, %c0_8, %c64], %8 {strides = array<i32>} : memref<8x16x96xf32, #tpu.memory_space<vmem>>, vector<8x15x32xf32>,
    %c0_9 = arith.constant 0 : index
    %c0_10 = arith.constant 0 : index
    %c0_11 = arith.constant 0 : index
    %10 = vector.load %arg10[%c0_9, %c0_10, %c0_11] : memref<8x16x96xf32, #tpu.memory_space<vmem>>, vector<8x16x96xf32>
    %11 = vector.shape_cast %10 : vector<8x16x96xf32> to vector<128x96xf32>
    %12 = arith.truncf %11 : vector<128x96xf32> to vector<128x96xbf16>
    %c0_12 = arith.constant 0 : index
    %c0_13 = arith.constant 0 : index
    %13 = vector.load %arg2[%c0_12, %c0_13] : memref<96x128xbf16, #tpu.memory_space<vmem>>, vector<96x128xbf16>
    %cst = arith.constant dense<0.000000e+00> : vector<128x128xf32>
    %14 = tpu.matmul %12, %13, %cst {dimension_numbers = #tpu.dot_dimension_numbers<[1], [0], [0], [1], [0, 0, 1, 1], [], []>} : vector<128x96xbf16>, vector<96x128xbf16>, vector<128x128xf32> -> vector<128x128xf32>
    %c0_14 = arith.constant 0 : index
    %c0_15 = arith.constant 0 : index
    %15 = vector.load %arg3[%c0_14, %c0_15] : memref<1x128xf32, #tpu.memory_space<vmem>>, vector<1x128xf32>
    %16 = vector.broadcast %15 : vector<1x128xf32> to vector<128x128xf32>
    %17 = arith.addf %14, %16 : vector<128x128xf32>
    %cst_16 = arith.constant 0.000000e+00 : f32
    %18 = vector.broadcast %cst_16 : f32 to vector<128x128xf32>
    %19 = arith.maximumf %17, %18 : vector<128x128xf32>
    %20 = vector.shape_cast %19 : vector<128x128xf32> to vector<8x16x128xf32>
    %cst_17 = arith.constant dense<0xFF800000> : vector<8x128xf32>
    %21 = vector.multi_reduction <maximumf>, %20, %cst_17 [1] : vector<8x16x128xf32> to vector<8x128xf32>
    %c0_18 = arith.constant 0 : index
    %c0_19 = arith.constant 0 : index
    %22 = vector.load %arg4[%c0_18, %c0_19] : memref<128x128xf32, #tpu.memory_space<vmem>>, vector<128x128xf32>
    %cst_20 = arith.constant dense<0.000000e+00> : vector<8x128xf32>
    %23 = tpu.matmul %21, %22, %cst_20 {dimension_numbers = #tpu.dot_dimension_numbers<[1], [0], [0], [1], [0, 0, 1, 1], [], []>} : vector<8x128xf32>, vector<128x128xf32>, vector<8x128xf32> -> vector<8x128xf32>
    %c0_21 = arith.constant 0 : index
    %c0_22 = arith.constant 0 : index
    %24 = vector.load %arg5[%c0_21, %c0_22] : memref<1x128xf32, #tpu.memory_space<vmem>>, vector<1x128xf32>
    %25 = vector.broadcast %24 : vector<1x128xf32> to vector<8x128xf32>
    %26 = arith.addf %23, %25 : vector<8x128xf32>
    %27 = math.tanh %26 : vector<8x128xf32>
    %c0_23 = arith.constant 0 : index
    %c0_24 = arith.constant 0 : index
    %28 = vector.load %arg8[%c0_23, %c0_24] : memref<8x128xf32, #tpu.memory_space<vmem>>, vector<8x128xf32>
    tpu.vector_store %arg8[%c0_23, %c0_24], %27 {strides = array<i32>} : memref<8x128xf32, #tpu.memory_space<vmem>>, vector<8x128xf32>,
    %29 = arith.mulf %27, %27 : vector<8x128xf32>
    %30 = tpu.concatenate %27, %29 in 1 : vector<8x128xf32>, vector<8x128xf32> -> vector<8x256xf32>
    %c0_25 = arith.constant 0 : index
    %c0_26 = arith.constant 0 : index
    %31 = vector.load %arg6[%c0_25, %c0_26] : memref<256x128xf32, #tpu.memory_space<vmem>>, vector<256x128xf32>
    %cst_27 = arith.constant dense<0.000000e+00> : vector<8x128xf32>
    %32 = tpu.matmul %30, %31, %cst_27 {dimension_numbers = #tpu.dot_dimension_numbers<[1], [0], [0], [1], [0, 0, 1, 1], [], []>} : vector<8x256xf32>, vector<256x128xf32>, vector<8x128xf32> -> vector<8x128xf32>
    %33 = vector.extract_strided_slice %32 {offsets = [0, 0], sizes = [8, 8], strides = [1, 1]} : vector<8x128xf32> to vector<8x8xf32>
    %34 = vector.extract_strided_slice %32 {offsets = [0, 8], sizes = [8, 8], strides = [1, 1]} : vector<8x128xf32> to vector<8x8xf32>
    %35 = vector.extract_strided_slice %32 {offsets = [0, 16], sizes = [8, 1], strides = [1, 1]} : vector<8x128xf32> to vector<8x1xf32>
    %c0_28 = arith.constant 0 : index
    %c0_29 = arith.constant 0 : index
    %36 = vector.load %arg7[%c0_28, %c0_29] : memref<1x1xf32, #tpu.memory_space<vmem>>, vector<1x1xf32>
    %37 = vector.broadcast %36 : vector<1x1xf32> to vector<8x1xf32>
    %38 = arith.addf %35, %37 : vector<8x1xf32>
    %39 = arith.mulf %33, %33 : vector<8x8xf32>
    %40 = arith.subf %39, %34 : vector<8x8xf32>
    %cst_30 = arith.constant dense<0.000000e+00> : vector<8xf32>
    %41 = vector.multi_reduction <add>, %40, %cst_30 [1] : vector<8x8xf32> to vector<8xf32>
    %42 = vector.shape_cast %41 : vector<8xf32> to vector<8x1xf32>
    %cst_31 = arith.constant 5.000000e-01 : f32
    %43 = vector.broadcast %cst_31 : f32 to vector<8x1xf32>
    %44 = arith.mulf %43, %42 : vector<8x1xf32>
    %45 = arith.addf %38, %44 : vector<8x1xf32>
    %46 = vector.shape_cast %45 : vector<8x1xf32> to vector<8x1xf32>
    %47 = vector.broadcast %46 : vector<8x1xf32> to vector<8x128xf32>
    %c0_32 = arith.constant 0 : index
    %c0_33 = arith.constant 0 : index
    %48 = vector.load %arg9[%c0_32, %c0_33] : memref<8x128xf32, #tpu.memory_space<vmem>>, vector<8x128xf32>
    tpu.vector_store %arg9[%c0_32, %c0_33], %47 {strides = array<i32>} : memref<8x128xf32, #tpu.memory_space<vmem>>, vector<8x128xf32>,
    return
  }
  func.func @transform_0(%arg0: i32) -> (i32, i32, i32) {
    %c0_i32 = arith.constant 0 : i32
    %c0_i32_0 = arith.constant 0 : i32
    %c0_i32_1 = arith.constant 0 : i32
    return %arg0, %c0_i32, %c0_i32_0 : i32, i32, i32
  }
  func.func @transform_1(%arg0: i32) -> (i32, i32) {
    %c0_i32 = arith.constant 0 : i32
    %c0_i32_0 = arith.constant 0 : i32
    %c0_i32_1 = arith.constant 0 : i32
    return %c0_i32, %c0_i32_0 : i32, i32
  }
  func.func @transform_2(%arg0: i32) -> (i32, i32) {
    %c0_i32 = arith.constant 0 : i32
    %c0_i32_0 = arith.constant 0 : i32
    %c0_i32_1 = arith.constant 0 : i32
    return %c0_i32, %c0_i32_0 : i32, i32
  }
  func.func @transform_3(%arg0: i32) -> (i32, i32) {
    %c0_i32 = arith.constant 0 : i32
    %c0_i32_0 = arith.constant 0 : i32
    %c0_i32_1 = arith.constant 0 : i32
    return %c0_i32, %c0_i32_0 : i32, i32
  }
  func.func @transform_4(%arg0: i32) -> (i32, i32) {
    %c0_i32 = arith.constant 0 : i32
    %c0_i32_0 = arith.constant 0 : i32
    %c0_i32_1 = arith.constant 0 : i32
    return %c0_i32, %c0_i32_0 : i32, i32
  }
  func.func @transform_5(%arg0: i32) -> (i32, i32) {
    %c0_i32 = arith.constant 0 : i32
    %c0_i32_0 = arith.constant 0 : i32
    %c0_i32_1 = arith.constant 0 : i32
    return %c0_i32, %c0_i32_0 : i32, i32
  }
  func.func @transform_6(%arg0: i32) -> (i32, i32) {
    %c0_i32 = arith.constant 0 : i32
    %c0_i32_0 = arith.constant 0 : i32
    %c0_i32_1 = arith.constant 0 : i32
    return %c0_i32, %c0_i32_0 : i32, i32
  }
  func.func @transform_7(%arg0: i32) -> (i32, i32) {
    %c0_i32 = arith.constant 0 : i32
    %c0_i32_0 = arith.constant 0 : i32
    return %arg0, %c0_i32 : i32, i32
  }
  func.func @transform_8(%arg0: i32) -> (i32, i32) {
    %c0_i32 = arith.constant 0 : i32
    %c0_i32_0 = arith.constant 0 : i32
    return %arg0, %c0_i32 : i32, i32
  }
}

</mosaic_0001>

<llo_original>
// kernel: target_net_forward.1
$region0: #{target_net_forward.1}
  #allocation0 [shape = 'u32[]', space=smem, size = 0x4, offset = 0x4, fixed_abs, tag = 'smem constant byte address 0x4 - core index']
  #allocation1 [shape = 'u32[144,128]{1,0:T(1,128)}', space=vmem, size = 0x12000, scoped, tag = 'internal scratch']
  #allocation2 [shape = 'f32[8,16,96]{2,1,0:T(8,128)}', space=vmem, size = 0x10000, scoped, tag = 'scratch operand']
  #allocation3 [shape = 'f32[1,1]{1,0:T(1,128)S(1)}', space=vmem, size = 0x200, scoped, tag = 'scoped memory for target_net_forward.1']
  %s0 = inlined_call_operand.vmem [shape: bf16[8,16,32], index: 0, kind: input, shape index: {}]
  %s1 = inlined_call_operand.vmem [shape: bf16[96,128], index: 1, kind: input, shape index: {}]
  %s2 = inlined_call_operand.vmem [shape: f32[1,128], index: 2, kind: input, shape index: {}, may-alias: {2,4}]
  %s3 = inlined_call_operand.vmem [shape: f32[128,128], index: 3, kind: input, shape index: {}]
  %s4 = inlined_call_operand.vmem [shape: f32[1,128], index: 4, kind: input, shape index: {}, may-alias: {2,4}]
  %s5 = inlined_call_operand.vmem [shape: f32[256,128], index: 5, kind: input, shape index: {}]
  %s6 = inlined_call_operand.<no memory space> [shape: f32[1,1], index: 6, kind: input, shape index: {}]
  %s7 = inlined_call_operand.vmem [shape: f32[8,128], index: 7, kind: output, shape index: {0}]
  %s8 = inlined_call_operand.vmem [shape: f32[8,128], index: 8, kind: output, shape index: {1}]
  %9 = xla_tuple %s7, %s8
  %s10 = sld [smem:[#allocation0]]
  $region50: #{target_net_forward.1} parent=0
    _
  %s12 = ssub.s32 1, %s10
  %s13 = scalar_select 0, %s12, %s10
  %v14 = vstv %s6
  %15 = vst [vmem:[#allocation3] sm:$0x1] %v14
  // Predicated region
  $region2: #{target_net_forward.1} parent=0 // pred_check
    _
  $region3: #{target_net_forward.1} parent=0 // pred_check_branch
    %17 = sbr.rel (0) target = $region5
  $region4: #{target_net_forward.1} parent=0 // pred_region
    _
  $region5: #{target_net_forward.1} parent=0 // pred_fallthru
    _
  // Predicated region
  $region6: #{target_net_forward.1} parent=0 // pred_check
    _
  $region7: #{target_net_forward.1} parent=0 // pred_check_branch
    %19 = sbr.rel (0) target = $region9
  $region8: #{target_net_forward.1} parent=0 // pred_region
    _
  $region9: #{target_net_forward.1} parent=0 // pred_fallthru
    _
  // Predicated region
  $region10: #{target_net_forward.1} parent=0 // pred_check
    _
  $region11: #{target_net_forward.1} parent=0 // pred_check_branch
    %21 = sbr.rel (0) target = $region13
  $region12: #{target_net_forward.1} parent=0 // pred_region
    _
  $region13: #{target_net_forward.1} parent=0 // pred_fallthru
    _
  // Predicated region
  $region14: #{target_net_forward.1} parent=0 // pred_check
    _
  $region15: #{target_net_forward.1} parent=0 // pred_check_branch
    %23 = sbr.rel (0) target = $region17
  $region16: #{target_net_forward.1} parent=0 // pred_region
    _
  $region17: #{target_net_forward.1} parent=0 // pred_fallthru
    _
  // Predicated region
  $region18: #{target_net_forward.1} parent=0 // pred_check
    _
  $region19: #{target_net_forward.1} parent=0 // pred_check_branch
    %25 = sbr.rel (0) target = $region21
  $region20: #{target_net_forward.1} parent=0 // pred_region
    _
  $region21: #{target_net_forward.1} parent=0 // pred_fallthru
    _
  // Predicated region
  $region22: #{target_net_forward.1} parent=0 // pred_check
    _
  $region23: #{target_net_forward.1} parent=0 // pred_check_branch
    %27 = sbr.rel (0) target = $region25
  $region24: #{target_net_forward.1} parent=0 // pred_region
    _
  $region25: #{target_net_forward.1} parent=0 // pred_fallthru
    _
  // Predicated region
  $region26: #{target_net_forward.1} parent=0 // pred_check
    _
  $region27: #{target_net_forward.1} parent=0 // pred_check_branch
    %29 = sbr.rel (0) target = $region29
  $region28: #{target_net_forward.1} parent=0 // pred_region
    _
  $region29: #{target_net_forward.1} parent=0 // pred_fallthru
    _
  %p31 = scmp.eq.s32.totalorder 0, 0
  // Predicated region
  $region30: #{target_net_forward.1} parent=0 // pred_check
    %p32 = pneg %p31
  $region31: #{target_net_forward.1} parent=0 // pred_check_branch
    %34 = sbr.rel (%p32) target = $region33
  $region32: #{target_net_forward.1} parent=0 // pred_region
    %vm35 = vcmask 253952
    %36 = vst.msk [vmem:[#allocation2] sm:$0x1] %vm35, 0.0
    %37 = vst.msk [vmem:[#allocation2 + $0x10] sm:$0x1] %vm35, 0.0
    %38 = vst.msk [vmem:[#allocation2 + $0x20] sm:$0x1] %vm35, 0.0
    %39 = vst.msk [vmem:[#allocation2 + $0x30] sm:$0x1] %vm35, 0.0
    %40 = vst.msk [vmem:[#allocation2 + $0x40] sm:$0x1] %vm35, 0.0
    %41 = vst.msk [vmem:[#allocation2 + $0x50] sm:$0x1] %vm35, 0.0
    %42 = vst.msk [vmem:[#allocation2 + $0x60] sm:$0x1] %vm35, 0.0
    %43 = vst.msk [vmem:[#allocation2 + $0x70] sm:$0x1] %vm35, 0.0
    %vm44 = vcmask 778752
    %45 = vst.msk [vmem:[#allocation2 + $0xf] sm:$0x1] %vm44, 0.0
    %46 = vst.msk [vmem:[#allocation2 + $0x1f] sm:$0x1] %vm44, 0.0
    %47 = vst.msk [vmem:[#allocation2 + $0x2f] sm:$0x1] %vm44, 0.0
    %48 = vst.msk [vmem:[#allocation2 + $0x3f] sm:$0x1] %vm44, 0.0
    %49 = vst.msk [vmem:[#allocation2 + $0x4f] sm:$0x1] %vm44, 0.0
    %50 = vst.msk [vmem:[#allocation2 + $0x5f] sm:$0x1] %vm44, 0.0
    %51 = vst.msk [vmem:[#allocation2 + $0x6f] sm:$0x1] %vm44, 0.0
    %52 = vst.msk [vmem:[#allocation2 + $0x7f] sm:$0x1] %vm44, 0.0
  $region33: #{target_net_forward.1} parent=0 // pred_fallthru
    _
  %v53 = vld [vmem:[%s0] sm:$0xf]
  %v54 = vld [vmem:[%s0 + $0x4] sm:$0xf]
  %v55 = vld [vmem:[%s0 + $0x8] sm:$0xf]
  %v56 = vld [vmem:[%s0 + $0xc] sm:$0xf]
  %v57 = vld [vmem:[%s0 + $0x10] sm:$0xf]
  %v58 = vld [vmem:[%s0 + $0x14] sm:$0xf]
  %v59 = vld [vmem:[%s0 + $0x18] sm:$0xf]
  %v60 = vld [vmem:[%s0 + $0x1c] sm:$0xf]
  %v61 = vld [vmem:[%s0 + $0x20] sm:$0xf]
  %v62 = vld [vmem:[%s0 + $0x24] sm:$0xf]
  %v63 = vld [vmem:[%s0 + $0x28] sm:$0xf]
  %v64 = vld [vmem:[%s0 + $0x2c] sm:$0xf]
  %v65 = vld [vmem:[%s0 + $0x30] sm:$0xf]
  %v66 = vld [vmem:[%s0 + $0x34] sm:$0xf]
  %v67 = vld [vmem:[%s0 + $0x38] sm:$0xf]
  %v68 = vld [vmem:[%s0 + $0x3c] sm:$0xf]
  %v69 = vunpack.c.l.bf16 %v53
  %v70 = vunpack.c.l.bf16 %v54
  %v71 = vunpack.c.l.bf16 %v55
  %v72 = vunpack.c.l.bf16 %v56
  %v73 = vunpack.c.l.bf16 %v57
  %v74 = vunpack.c.l.bf16 %v58
  %v75 = vunpack.c.l.bf16 %v59
  %v76 = vunpack.c.l.bf16 %v60
  %v77 = vunpack.c.l.bf16 %v61
  %v78 = vunpack.c.l.bf16 %v62
  %v79 = vunpack.c.l.bf16 %v63
  %v80 = vunpack.c.l.bf16 %v64
  %v81 = vunpack.c.l.bf16 %v65
  %v82 = vunpack.c.l.bf16 %v66
  %v83 = vunpack.c.l.bf16 %v67
  %v84 = vunpack.c.l.bf16 %v68
  %vm85 = vcmask 261120
  %86 = vst.msk [vmem:[#allocation2 + $0x1] sm:$0xff] %vm85, %v69
  %vm87 = vcmask 260096
  %88 = vst.msk [vmem:[#allocation2 + $0x9] sm:$0x7f] %vm87, %v70
  %89 = vst.msk [vmem:[#allocation2 + $0x11] sm:$0xff] %vm85, %v71
  %90 = vst.msk [vmem:[#allocation2 + $0x19] sm:$0x7f] %vm87, %v72
  %91 = vst.msk [vmem:[#allocation2 + $0x21] sm:$0xff] %vm85, %v73
  %92 = vst.msk [vmem:[#allocation2 + $0x29] sm:$0x7f] %vm87, %v74
  %93 = vst.msk [vmem:[#allocation2 + $0x31] sm:$0xff] %vm85, %v75
  %94 = vst.msk [vmem:[#allocation2 + $0x39] sm:$0x7f] %vm87, %v76
  %95 = vst.msk [vmem:[#allocation2 + $0x41] sm:$0xff] %vm85, %v77
  %96 = vst.msk [vmem:[#allocation2 + $0x49] sm:$0x7f] %vm87, %v78
  %97 = vst.msk [vmem:[#allocation2 + $0x51] sm:$0xff] %vm85, %v79
  %98 = vst.msk [vmem:[#allocation2 + $0x59] sm:$0x7f] %vm87, %v80
  %99 = vst.msk [vmem:[#allocation2 + $0x61] sm:$0xff] %vm85, %v81
  %100 = vst.msk [vmem:[#allocation2 + $0x69] sm:$0x7f] %vm87, %v82
  %101 = vst.msk [vmem:[#allocation2 + $0x71] sm:$0xff] %vm85, %v83
  %102 = vst.msk [vmem:[#allocation2 + $0x79] sm:$0x7f] %vm87, %v84
  %119 = vrot.lane.b32.xlu0 %v69, 32
  %v120 = vpop.permute.xlu0 %119
  %121 = vrot.lane.b32.xlu0 %v70, 32
  %v122 = vpop.permute.xlu0 %121
  %123 = vrot.lane.b32.xlu0 %v71, 32
  %v124 = vpop.permute.xlu0 %123
  %125 = vrot.lane.b32.xlu0 %v72, 32
  %v126 = vpop.permute.xlu0 %125
  %127 = vrot.lane.b32.xlu0 %v73, 32
  %v128 = vpop.permute.xlu0 %127
  %129 = vrot.lane.b32.xlu0 %v74, 32
  %v130 = vpop.permute.xlu0 %129
  %131 = vrot.lane.b32.xlu0 %v75, 32
  %v132 = vpop.permute.xlu0 %131
  %133 = vrot.lane.b32.xlu0 %v76, 32
  %v134 = vpop.permute.xlu0 %133
  %135 = vrot.lane.b32.xlu0 %v77, 32
  %v136 = vpop.permute.xlu0 %135
  %137 = vrot.lane.b32.xlu0 %v78, 32
  %v138 = vpop.permute.xlu0 %137
  %139 = vrot.lane.b32.xlu0 %v79, 32
  %v140 = vpop.permute.xlu0 %139
  %141 = vrot.lane.b32.xlu0 %v80, 32
  %v142 = vpop.permute.xlu0 %141
  %143 = vrot.lane.b32.xlu0 %v81, 32
  %v144 = vpop.permute.xlu0 %143
  %145 = vrot.lane.b32.xlu0 %v82, 32
  %v146 = vpop.permute.xlu0 %145
  %147 = vrot.lane.b32.xlu0 %v83, 32
  %v148 = vpop.permute.xlu0 %147
  %149 = vrot.lane.b32.xlu0 %v84, 32
  %v150 = vpop.permute.xlu0 %149
  %vm167 = vcmask 523520
  %168 = vst.msk [vmem:[#allocation2] sm:$0xff] %vm167, %v120
  %169 = vst.msk [vmem:[#allocation2 + $0x8] sm:$0xff] %vm167, %v122
  %170 = vst.msk [vmem:[#allocation2 + $0x10] sm:$0xff] %vm167, %v124
  %171 = vst.msk [vmem:[#allocation2 + $0x18] sm:$0xff] %vm167, %v126
  %172 = vst.msk [vmem:[#allocation2 + $0x20] sm:$0xff] %vm167, %v128
  %173 = vst.msk [vmem:[#allocation2 + $0x28] sm:$0xff] %vm167, %v130
  %174 = vst.msk [vmem:[#allocation2 + $0x30] sm:$0xff] %vm167, %v132
  %175 = vst.msk [vmem:[#allocation2 + $0x38] sm:$0xff] %vm167, %v134
  %176 = vst.msk [vmem:[#allocation2 + $0x40] sm:$0xff] %vm167, %v136
  %177 = vst.msk [vmem:[#allocation2 + $0x48] sm:$0xff] %vm167, %v138
  %178 = vst.msk [vmem:[#allocation2 + $0x50] sm:$0xff] %vm167, %v140
  %179 = vst.msk [vmem:[#allocation2 + $0x58] sm:$0xff] %vm167, %v142
  %180 = vst.msk [vmem:[#allocation2 + $0x60] sm:$0xff] %vm167, %v144
  %181 = vst.msk [vmem:[#allocation2 + $0x68] sm:$0xff] %vm167, %v146
  %182 = vst.msk [vmem:[#allocation2 + $0x70] sm:$0xff] %vm167, %v148
  %183 = vst.msk [vmem:[#allocation2 + $0x78] sm:$0xff] %vm167, %v150
  %184 = vrot.lane.b32.xlu0 %v69, 64
  %v185 = vpop.permute.xlu0 %184
  %186 = vrot.lane.b32.xlu0 %v70, 64
  %v187 = vpop.permute.xlu0 %186
  %188 = vrot.lane.b32.xlu0 %v71, 64
  %v189 = vpop.permute.xlu0 %188
  %190 = vrot.lane.b32.xlu0 %v72, 64
  %v191 = vpop.permute.xlu0 %190
  %192 = vrot.lane.b32.xlu0 %v73, 64
  %v193 = vpop.permute.xlu0 %192
  %194 = vrot.lane.b32.xlu0 %v74, 64
  %v195 = vpop.permute.xlu0 %194
  %196 = vrot.lane.b32.xlu0 %v75, 64
  %v197 = vpop.permute.xlu0 %196
  %198 = vrot.lane.b32.xlu0 %v76, 64
  %v199 = vpop.permute.xlu0 %198
  %200 = vrot.lane.b32.xlu0 %v77, 64
  %v201 = vpop.permute.xlu0 %200
  %202 = vrot.lane.b32.xlu0 %v78, 64
  %v203 = vpop.permute.xlu0 %202
  %204 = vrot.lane.b32.xlu0 %v79, 64
  %v205 = vpop.permute.xlu0 %204
  %206 = vrot.lane.b32.xlu0 %v80, 64
  %v207 = vpop.permute.xlu0 %206
  %208 = vrot.lane.b32.xlu0 %v81, 64
  %v209 = vpop.permute.xlu0 %208
  %210 = vrot.lane.b32.xlu0 %v82, 64
  %v211 = vpop.permute.xlu0 %210
  %212 = vrot.lane.b32.xlu0 %v83, 64
  %v213 = vpop.permute.xlu0 %212
  %214 = vrot.lane.b32.xlu0 %v84, 64
  %v215 = vpop.permute.xlu0 %214
  %vm232 = vcmask 785921
  %233 = vst.msk [vmem:[#allocation2 - $0x1] sm:$0xfe] %vm232, %v185
  %vm234 = vcmask 785920
  %235 = vst.msk [vmem:[#allocation2 + $0x7] sm:$0xff] %vm234, %v187
  %236 = vst.msk [vmem:[#allocation2 + $0xf] sm:$0xfe] %vm232, %v189
  %237 = vst.msk [vmem:[#allocation2 + $0x17] sm:$0xff] %vm234, %v191
  %238 = vst.msk [vmem:[#allocation2 + $0x1f] sm:$0xfe] %vm232, %v193
  %239 = vst.msk [vmem:[#allocation2 + $0x27] sm:$0xff] %vm234, %v195
  %240 = vst.msk [vmem:[#allocation2 + $0x2f] sm:$0xfe] %vm232, %v197
  %241 = vst.msk [vmem:[#allocation2 + $0x37] sm:$0xff] %vm234, %v199
  %242 = vst.msk [vmem:[#allocation2 + $0x3f] sm:$0xfe] %vm232, %v201
  %243 = vst.msk [vmem:[#allocation2 + $0x47] sm:$0xff] %vm234, %v203
  %244 = vst.msk [vmem:[#allocation2 + $0x4f] sm:$0xfe] %vm232, %v205
  %245 = vst.msk [vmem:[#allocation2 + $0x57] sm:$0xff] %vm234, %v207
  %246 = vst.msk [vmem:[#allocation2 + $0x5f] sm:$0xfe] %vm232, %v209
  %247 = vst.msk [vmem:[#allocation2 + $0x67] sm:$0xff] %vm234, %v211
  %248 = vst.msk [vmem:[#allocation2 + $0x6f] sm:$0xfe] %vm232, %v213
  %249 = vst.msk [vmem:[#allocation2 + $0x77] sm:$0xff] %vm234, %v215
  %v250 = vld [vmem:[#allocation2] sm:$0xff]
  %v251 = vld [vmem:[#allocation2 + $0x8] sm:$0xff]
  %v252 = vld [vmem:[#allocation2 + $0x10] sm:$0xff]
  %v253 = vld [vmem:[#allocation2 + $0x18] sm:$0xff]
  %v254 = vld [vmem:[#allocation2 + $0x20] sm:$0xff]
  %v255 = vld [vmem:[#allocation2 + $0x28] sm:$0xff]
  %v256 = vld [vmem:[#allocation2 + $0x30] sm:$0xff]
  %v257 = vld [vmem:[#allocation2 + $0x38] sm:$0xff]
  %v258 = vld [vmem:[#allocation2 + $0x40] sm:$0xff]
  %v259 = vld [vmem:[#allocation2 + $0x48] sm:$0xff]
  %v260 = vld [vmem:[#allocation2 + $0x50] sm:$0xff]
  %v261 = vld [vmem:[#allocation2 + $0x58] sm:$0xff]
  %v262 = vld [vmem:[#allocation2 + $0x60] sm:$0xff]
  %v263 = vld [vmem:[#allocation2 + $0x68] sm:$0xff]
  %v264 = vld [vmem:[#allocation2 + $0x70] sm:$0xff]
  %v265 = vld [vmem:[#allocation2 + $0x78] sm:$0xff]
  %v266 = vpack.c.bf16 %v251, %v250
  %v267 = vpack.c.bf16 %v253, %v252
  %v268 = vpack.c.bf16 %v255, %v254
  %v269 = vpack.c.bf16 %v257, %v256
  %v270 = vpack.c.bf16 %v259, %v258
  %v271 = vpack.c.bf16 %v261, %v260
  %v272 = vpack.c.bf16 %v263, %v262
  %v273 = vpack.c.bf16 %v265, %v264
  %v274 = vld [vmem:[%s1] sm:$0xf]
  %v275 = vld [vmem:[%s1 + $0x4] sm:$0xf]
  %v276 = vld [vmem:[%s1 + $0x8] sm:$0xf]
  %v277 = vld [vmem:[%s1 + $0xc] sm:$0xf]
  %v278 = vld [vmem:[%s1 + $0x10] sm:$0xf]
  %v279 = vld [vmem:[%s1 + $0x14] sm:$0xf]
  %v280 = vld [vmem:[%s1 + $0x18] sm:$0xf]
  %v281 = vld [vmem:[%s1 + $0x1c] sm:$0xf]
  %v282 = vld [vmem:[%s1 + $0x20] sm:$0xf]
  %v283 = vld [vmem:[%s1 + $0x24] sm:$0xf]
  %v284 = vld [vmem:[%s1 + $0x28] sm:$0xf]
  %v285 = vld [vmem:[%s1 + $0x2c] sm:$0xf]
  %v286 = vld [vmem:[%s2] sm:$0x1]
  %v288 = vlaneseq
  %v289 = vshrl.u32 %v288, 7
  %v290 = vsub.s32 0, %v289
  %v291 = vrot.slane %v286, %v290
  %v305 = vunpack.c.l.b16 %v274
  %v306 = vunpack.c.l.b16 %v275
  %v307 = vunpack.c.l.b16 %v276
  %v308 = vunpack.c.l.b16 %v277
  %v309 = vunpack.c.l.b16 %v278
  %v310 = vunpack.c.l.b16 %v279
  %v311 = vunpack.c.l.b16 %v280
  %v312 = vunpack.c.l.b16 %v281
  %v313 = vunpack.c.l.b16 %v282
  %v314 = vunpack.c.l.b16 %v283
  %v315 = vunpack.c.l.b16 %v284
  %v316 = vunpack.c.l.b16 %v285
  %v317 = vpack.c.b16 %v306, %v305
  %v318 = vpack.c.b16 %v308, %v307
  %v319 = vpack.c.b16 %v310, %v309
  %v320 = vpack.c.b16 %v312, %v311
  %v321 = vpack.c.b16 %v314, %v313
  %v322 = vpack.c.b16 %v316, %v315
  %vm329 = vcmask 785408
  %v331 = vsel %vm329, %v266, 0
  %v334 = vsel %vm329, %v267, 0
  %v337 = vsel %vm329, %v268, 0
  %v340 = vsel %vm329, %v269, 0
  %v343 = vsel %vm329, %v270, 0
  %v346 = vsel %vm329, %v271, 0
  %v349 = vsel %vm329, %v272, 0
  %v352 = vsel %vm329, %v273, 0
  %354 = vmatprep.subr.bf16.mxu0 0
  %355 = vmatpush1.bf16.msra.mxu0 0
  %356 = vmatprep.subr.bf16.mxu0 0
  %357 = vmatpush1.bf16.msra.mxu0 0
  %358 = vmatprep.subr.bf16.mxu0 0
  %359 = vmatpush1.bf16.msra.mxu0 %v322
  %360 = vmatprep.subr.bf16.mxu0 0
  %361 = vmatpush1.bf16.msra.mxu0 %v321
  %362 = vmatprep.subr.bf16.mxu0 0
  %363 = vmatpush1.bf16.msra.mxu0 %v320
  %364 = vmatprep.subr.bf16.mxu0 0
  %365 = vmatpush1.bf16.msra.mxu0 %v319
  %366 = vmatprep.subr.bf16.mxu0 0
  %367 = vmatpush1.bf16.msra.mxu0 %v318
  %368 = vmatprep.subr.bf16.mxu0 0
  %369 = vmatpush1.bf16.msra.mxu0 %v317
  %370 = vmatprep.subr.bf16.mxu0 0
  %371 = vmatpush2.bf16.msra.mxu0 0
  %372 = vmatprep.subr.bf16.mxu0 0
  %373 = vmatpush2.bf16.msra.mxu0 0
  %374 = vmatprep.subr.bf16.mxu0 0
  %375 = vmatpush2.bf16.msra.mxu0 0
  %376 = vmatprep.subr.bf16.mxu0 0
  %377 = vmatpush2.bf16.msra.mxu0 0
  %378 = vmatprep.subr.bf16.mxu0 0
  %379 = vmatpush2.bf16.msra.mxu0 0
  %380 = vmatprep.subr.bf16.mxu0 0
  %381 = vmatpush2.bf16.msra.mxu0 0
  %382 = vmatprep.subr.bf16.mxu0 0
  %383 = vmatpush2.bf16.msra.mxu0 0
  %384 = vmatprep.subr.bf16.mxu0 0
  %385 = vmatpush2.bf16.msra.mxu0 0
  %386 = vmatprep.mubr.bf16.mxu0 0
  %387 = vmatmul.mubr.bf16.gmra.mxu0 %v331
  %v388 = vpop.f32.mrf.mxu0
  %v389 = vadd.f32 %v291, %v388
  %v390 = vpop.f32.mrf.mxu0
  %v391 = vpop.f32.mrf.mxu0
  %v392 = vadd.f32 %v291, %v391
  %v393 = vpop.f32.mrf.mxu0
  %394 = vmatprep.mubr.bf16.mxu0 0
  %395 = vmatmul.mubr.bf16.gmra.mxu0 %v334
  %v396 = vpop.f32.mrf.mxu0
  %v397 = vadd.f32 %v291, %v396
  %v398 = vpop.f32.mrf.mxu0
  %v399 = vpop.f32.mrf.mxu0
  %v400 = vadd.f32 %v291, %v399
  %v401 = vpop.f32.mrf.mxu0
  %402 = vmatprep.mubr.bf16.mxu0 0
  %403 = vmatmul.mubr.bf16.gmra.mxu0 %v337
  %v404 = vpop.f32.mrf.mxu0
  %v405 = vadd.f32 %v291, %v404
  %v406 = vpop.f32.mrf.mxu0
  %v407 = vpop.f32.mrf.mxu0
  %v408 = vadd.f32 %v291, %v407
  %v409 = vpop.f32.mrf.mxu0
  %410 = vmatprep.mubr.bf16.mxu0 0
  %411 = vmatmul.mubr.bf16.gmra.mxu0 %v340
  %v412 = vpop.f32.mrf.mxu0
  %v413 = vadd.f32 %v291, %v412
  %v414 = vpop.f32.mrf.mxu0
  %v415 = vpop.f32.mrf.mxu0
  %v416 = vadd.f32 %v291, %v415
  %v417 = vpop.f32.mrf.mxu0
  %418 = vmatprep.mubr.bf16.mxu0 0
  %419 = vmatmul.mubr.bf16.gmra.mxu0 %v343
  %v420 = vpop.f32.mrf.mxu0
  %v421 = vadd.f32 %v291, %v420
  %v422 = vpop.f32.mrf.mxu0
  %v423 = vpop.f32.mrf.mxu0
  %v424 = vadd.f32 %v291, %v423
  %v425 = vpop.f32.mrf.mxu0
  %426 = vmatprep.mubr.bf16.mxu0 0
  %427 = vmatmul.mubr.bf16.gmra.mxu0 %v346
  %v428 = vpop.f32.mrf.mxu0
  %v429 = vadd.f32 %v291, %v428
  %v430 = vpop.f32.mrf.mxu0
  %v431 = vpop.f32.mrf.mxu0
  %v432 = vadd.f32 %v291, %v431
  %v433 = vpop.f32.mrf.mxu0
  %434 = vmatprep.mubr.bf16.mxu0 0
  %435 = vmatmul.mubr.bf16.gmra.mxu0 %v349
  %v436 = vpop.f32.mrf.mxu0
  %v437 = vadd.f32 %v291, %v436
  %v438 = vpop.f32.mrf.mxu0
  %v439 = vpop.f32.mrf.mxu0
  %v440 = vadd.f32 %v291, %v439
  %v441 = vpop.f32.mrf.mxu0
  %442 = vmatprep.mubr.bf16.mxu0 0
  %443 = vmatmul.mubr.bf16.gmra.mxu0 %v352
  %v444 = vpop.f32.mrf.mxu0
  %v445 = vadd.f32 %v291, %v444
  %v446 = vpop.f32.mrf.mxu0
  %v447 = vpop.f32.mrf.mxu0
  %v448 = vadd.f32 %v291, %v447
  %v449 = vpop.f32.mrf.mxu0
  %450 = vdwg.mxu0
  %v451 = vmax.f32 %v389, 0.0
  %v452 = vmax.f32 %v392, 0.0
  %v453 = vmax.f32 %v397, 0.0
  %v454 = vmax.f32 %v400, 0.0
  %v455 = vmax.f32 %v405, 0.0
  %v456 = vmax.f32 %v408, 0.0
  %v457 = vmax.f32 %v413, 0.0
  %v458 = vmax.f32 %v416, 0.0
  %v459 = vmax.f32 %v421, 0.0
  %v460 = vmax.f32 %v424, 0.0
  %v461 = vmax.f32 %v429, 0.0
  %v462 = vmax.f32 %v432, 0.0
  %v463 = vmax.f32 %v437, 0.0
  %v464 = vmax.f32 %v440, 0.0
  %v465 = vmax.f32 %v445, 0.0
  %v466 = vmax.f32 %v448, 0.0
  %v467 = vmax.f32 %v451, %v452
  %v468 = vrot.slane %v467, 4
  %v469 = vmax.f32 %v467, %v468
  %v470 = vrot.slane %v469, 2
  %v471 = vmax.f32 %v469, %v470
  %v472 = vrot.slane %v471, 1
  %v473 = vmax.f32 %v471, %v472
  %v474 = vmax.f32 %v453, %v454
  %v475 = vrot.slane %v474, 4
  %v476 = vmax.f32 %v474, %v475
  %v477 = vrot.slane %v476, 2
  %v478 = vmax.f32 %v476, %v477
  %v479 = vrot.slane %v478, 1
  %v480 = vmax.f32 %v478, %v479
  %v481 = vmax.f32 %v455, %v456
  %v482 = vrot.slane %v481, 4
  %v483 = vmax.f32 %v481, %v482
  %v484 = vrot.slane %v483, 2
  %v485 = vmax.f32 %v483, %v484
  %v486 = vrot.slane %v485, 1
  %v487 = vmax.f32 %v485, %v486
  %v488 = vmax.f32 %v457, %v458
  %v489 = vrot.slane %v488, 4
  %v490 = vmax.f32 %v488, %v489
  %v491 = vrot.slane %v490, 2
  %v492 = vmax.f32 %v490, %v491
  %v493 = vrot.slane %v492, 1
  %v494 = vmax.f32 %v492, %v493
  %v495 = vmax.f32 %v459, %v460
  %v496 = vrot.slane %v495, 4
  %v497 = vmax.f32 %v495, %v496
  %v498 = vrot.slane %v497, 2
  %v499 = vmax.f32 %v497, %v498
  %v500 = vrot.slane %v499, 1
  %v501 = vmax.f32 %v499, %v500
  %v502 = vmax.f32 %v461, %v462
  %v503 = vrot.slane %v502, 4
  %v504 = vmax.f32 %v502, %v503
  %v505 = vrot.slane %v504, 2
  %v506 = vmax.f32 %v504, %v505
  %v507 = vrot.slane %v506, 1
  %v508 = vmax.f32 %v506, %v507
  %v509 = vmax.f32 %v463, %v464
  %v510 = vrot.slane %v509, 4
  %v511 = vmax.f32 %v509, %v510
  %v512 = vrot.slane %v511, 2
  %v513 = vmax.f32 %v511, %v512
  %v514 = vrot.slane %v513, 1
  %v515 = vmax.f32 %v513, %v514
  %v516 = vmax.f32 %v465, %v466
  %v517 = vrot.slane %v516, 4
  %v518 = vmax.f32 %v516, %v517
  %v519 = vrot.slane %v518, 2
  %v520 = vmax.f32 %v518, %v519
  %v521 = vrot.slane %v520, 1
  %v522 = vmax.f32 %v520, %v521
  %v523 = vld [vmem:[%s3] sm:$0xff]
  %v524 = vld [vmem:[%s3 + $0x8] sm:$0xff]
  %v525 = vld [vmem:[%s3 + $0x10] sm:$0xff]
  %v526 = vld [vmem:[%s3 + $0x18] sm:$0xff]
  %v527 = vld [vmem:[%s3 + $0x20] sm:$0xff]
  %v528 = vld [vmem:[%s3 + $0x28] sm:$0xff]
  %v529 = vld [vmem:[%s3 + $0x30] sm:$0xff]
  %v530 = vld [vmem:[%s3 + $0x38] sm:$0xff]
  %v531 = vld [vmem:[%s3 + $0x40] sm:$0xff]
  %v532 = vld [vmem:[%s3 + $0x48] sm:$0xff]
  %v533 = vld [vmem:[%s3 + $0x50] sm:$0xff]
  %v534 = vld [vmem:[%s3 + $0x58] sm:$0xff]
  %v535 = vld [vmem:[%s3 + $0x60] sm:$0xff]
  %v536 = vld [vmem:[%s3 + $0x68] sm:$0xff]
  %v537 = vld [vmem:[%s3 + $0x70] sm:$0xff]
  %v538 = vld [vmem:[%s3 + $0x78] sm:$0xff]
  %v539 = vld [vmem:[%s4] sm:$0x1]
  %v541 = vlaneseq
  %v542 = vshrl.u32 %v541, 7
  %v543 = vsub.s32 0, %v542
  %v544 = vrot.slane %v539, %v543
  %vm554 = vcmask 1041409
  %v555 = vsel %vm554, %v480, %v473
  %vm556 = vcmask 1042434
  %v557 = vsel %vm556, %v487, %v555
  %vm558 = vcmask 1043459
  %v559 = vsel %vm558, %v494, %v557
  %vm560 = vcmask 1044484
  %v561 = vsel %vm560, %v501, %v559
  %vm562 = vcmask 1045509
  %v563 = vsel %vm562, %v508, %v561
  %vm564 = vcmask 1046534
  %v565 = vsel %vm564, %v515, %v563
  %vm566 = vcmask 1047559
  %v567 = vsel %vm566, %v522, %v565
  %569 = vmatprep.subr.mxu0 0.0
  %570 = vmatpush1.msra.mxu0 %v538
  %571 = vmatprep.subr.mxu0 0.0
  %572 = vmatpush1.msra.mxu0 %v537
  %573 = vmatprep.subr.mxu0 0.0
  %574 = vmatpush1.msra.mxu0 %v536
  %575 = vmatprep.subr.mxu0 0.0
  %576 = vmatpush1.msra.mxu0 %v535
  %577 = vmatprep.subr.mxu0 0.0
  %578 = vmatpush1.msra.mxu0 %v534
  %579 = vmatprep.subr.mxu0 0.0
  %580 = vmatpush1.msra.mxu0 %v533
  %581 = vmatprep.subr.mxu0 0.0
  %582 = vmatpush1.msra.mxu0 %v532
  %583 = vmatprep.subr.mxu0 0.0
  %584 = vmatpush1.msra.mxu0 %v531
  %585 = vmatprep.subr.mxu0 0.0
  %586 = vmatpush1.msra.mxu0 %v530
  %587 = vmatprep.subr.mxu0 0.0
  %588 = vmatpush1.msra.mxu0 %v529
  %589 = vmatprep.subr.mxu0 0.0
  %590 = vmatpush1.msra.mxu0 %v528
  %591 = vmatprep.subr.mxu0 0.0
  %592 = vmatpush1.msra.mxu0 %v527
  %593 = vmatprep.subr.mxu0 0.0
  %594 = vmatpush1.msra.mxu0 %v526
  %595 = vmatprep.subr.mxu0 0.0
  %596 = vmatpush1.msra.mxu0 %v525
  %597 = vmatprep.subr.mxu0 0.0
  %598 = vmatpush1.msra.mxu0 %v524
  %599 = vmatprep.subr.mxu0 0.0
  %600 = vmatpush1.msra.mxu0 %v523
  %601 = vmatprep.subr.mxu0 0.0
  %602 = vmatpush2.msra.mxu0 0.0
  %603 = vmatprep.subr.mxu0 0.0
  %604 = vmatpush2.msra.mxu0 0.0
  %605 = vmatprep.subr.mxu0 0.0
  %606 = vmatpush2.msra.mxu0 0.0
  %607 = vmatprep.subr.mxu0 0.0
  %608 = vmatpush2.msra.mxu0 0.0
  %609 = vmatprep.subr.mxu0 0.0
  %610 = vmatpush2.msra.mxu0 0.0
  %611 = vmatprep.subr.mxu0 0.0
  %612 = vmatpush2.msra.mxu0 0.0
  %613 = vmatprep.subr.mxu0 0.0
  %614 = vmatpush2.msra.mxu0 0.0
  %615 = vmatprep.subr.mxu0 0.0
  %616 = vmatpush2.msra.mxu0 0.0
  %617 = vmatprep.subr.mxu0 0.0
  %618 = vmatpush2.msra.mxu0 0.0
  %619 = vmatprep.subr.mxu0 0.0
  %620 = vmatpush2.msra.mxu0 0.0
  %621 = vmatprep.subr.mxu0 0.0
  %622 = vmatpush2.msra.mxu0 0.0
  %623 = vmatprep.subr.mxu0 0.0
  %624 = vmatpush2.msra.mxu0 0.0
  %625 = vmatprep.subr.mxu0 0.0
  %626 = vmatpush2.msra.mxu0 0.0
  %627 = vmatprep.subr.mxu0 0.0
  %628 = vmatpush2.msra.mxu0 0.0
  %629 = vmatprep.subr.mxu0 0.0
  %630 = vmatpush2.msra.mxu0 0.0
  %631 = vmatprep.subr.mxu0 0.0
  %632 = vmatpush2.msra.mxu0 0.0
  %633 = vmatprep.mubr.f32.mxu0 0.0
  %634 = vmatmul.mubr.f32.gmra.mxu0 %v567
  %v635 = vpop.f32.mrf.mxu0
  %v636 = vadd.f32 %v544, %v635
  %v637 = vpop.f32.mrf.mxu0
  %638 = vdwg.mxu0
  %v639 = vtanh.pop %v636
  %640 = vst [vmem:[%s7] sm:$0xff] %v639
  %v641 = vmul.f32 %v639, %v639
  %v642 = vld [vmem:[%s5] sm:$0xff]
  %v643 = vld [vmem:[%s5 + $0x8] sm:$0xff]
  %v644 = vld [vmem:[%s5 + $0x10] sm:$0xff]
  %v645 = vld [vmem:[%s5 + $0x18] sm:$0xff]
  %v646 = vld [vmem:[%s5 + $0x20] sm:$0xff]
  %v647 = vld [vmem:[%s5 + $0x28] sm:$0xff]
  %v648 = vld [vmem:[%s5 + $0x30] sm:$0xff]
  %v649 = vld [vmem:[%s5 + $0x38] sm:$0xff]
  %v650 = vld [vmem:[%s5 + $0x40] sm:$0xff]
  %v651 = vld [vmem:[%s5 + $0x48] sm:$0xff]
  %v652 = vld [vmem:[%s5 + $0x50] sm:$0xff]
  %v653 = vld [vmem:[%s5 + $0x58] sm:$0xff]
  %v654 = vld [vmem:[%s5 + $0x60] sm:$0xff]
  %v655 = vld [vmem:[%s5 + $0x68] sm:$0xff]
  %v656 = vld [vmem:[%s5 + $0x70] sm:$0xff]
  %v657 = vld [vmem:[%s5 + $0x78] sm:$0xff]
  %v658 = vld [vmem:[%s5 + $0x80] sm:$0xff]
  %v659 = vld [vmem:[%s5 + $0x88] sm:$0xff]
  %v660 = vld [vmem:[%s5 + $0x90] sm:$0xff]
  %v661 = vld [vmem:[%s5 + $0x98] sm:$0xff]
  %v662 = vld [vmem:[%s5 + $0xa0] sm:$0xff]
  %v663 = vld [vmem:[%s5 + $0xa8] sm:$0xff]
  %v664 = vld [vmem:[%s5 + $0xb0] sm:$0xff]
  %v665 = vld [vmem:[%s5 + $0xb8] sm:$0xff]
  %v666 = vld [vmem:[%s5 + $0xc0] sm:$0xff]
  %v667 = vld [vmem:[%s5 + $0xc8] sm:$0xff]
  %v668 = vld [vmem:[%s5 + $0xd0] sm:$0xff]
  %v669 = vld [vmem:[%s5 + $0xd8] sm:$0xff]
  %v670 = vld [vmem:[%s5 + $0xe0] sm:$0xff]
  %v671 = vld [vmem:[%s5 + $0xe8] sm:$0xff]
  %v672 = vld [vmem:[%s5 + $0xf0] sm:$0xff]
  %v673 = vld [vmem:[%s5 + $0xf8] sm:$0xff]
  %674 = vmatprep.subr.mxu0 0.0
  %675 = vmatpush1.msra.mxu0 %v657
  %676 = vmatprep.subr.mxu0 0.0
  %677 = vmatpush1.msra.mxu0 %v656
  %678 = vmatprep.subr.mxu0 0.0
  %679 = vmatpush1.msra.mxu0 %v655
  %680 = vmatprep.subr.mxu0 0.0
  %681 = vmatpush1.msra.mxu0 %v654
  %682 = vmatprep.subr.mxu0 0.0
  %683 = vmatpush1.msra.mxu0 %v653
  %684 = vmatprep.subr.mxu0 0.0
  %685 = vmatpush1.msra.mxu0 %v652
  %686 = vmatprep.subr.mxu0 0.0
  %687 = vmatpush1.msra.mxu0 %v651
  %688 = vmatprep.subr.mxu0 0.0
  %689 = vmatpush1.msra.mxu0 %v650
  %690 = vmatprep.subr.mxu0 0.0
  %691 = vmatpush1.msra.mxu0 %v649
  %692 = vmatprep.subr.mxu0 0.0
  %693 = vmatpush1.msra.mxu0 %v648
  %694 = vmatprep.subr.mxu0 0.0
  %695 = vmatpush1.msra.mxu0 %v647
  %696 = vmatprep.subr.mxu0 0.0
  %697 = vmatpush1.msra.mxu0 %v646
  %698 = vmatprep.subr.mxu0 0.0
  %699 = vmatpush1.msra.mxu0 %v645
  %700 = vmatprep.subr.mxu0 0.0
  %701 = vmatpush1.msra.mxu0 %v644
  %702 = vmatprep.subr.mxu0 0.0
  %703 = vmatpush1.msra.mxu0 %v643
  %704 = vmatprep.subr.mxu0 0.0
  %705 = vmatpush1.msra.mxu0 %v642
  %706 = vmatprep.subr.mxu0 0.0
  %707 = vmatpush2.msra.mxu0 %v673
  %708 = vmatprep.subr.mxu0 0.0
  %709 = vmatpush2.msra.mxu0 %v672
  %710 = vmatprep.subr.mxu0 0.0
  %711 = vmatpush2.msra.mxu0 %v671
  %712 = vmatprep.subr.mxu0 0.0
  %713 = vmatpush2.msra.mxu0 %v670
  %714 = vmatprep.subr.mxu0 0.0
  %715 = vmatpush2.msra.mxu0 %v669
  %716 = vmatprep.subr.mxu0 0.0
  %717 = vmatpush2.msra.mxu0 %v668
  %718 = vmatprep.subr.mxu0 0.0
  %719 = vmatpush2.msra.mxu0 %v667
  %720 = vmatprep.subr.mxu0 0.0
  %721 = vmatpush2.msra.mxu0 %v666
  %722 = vmatprep.subr.mxu0 0.0
  %723 = vmatpush2.msra.mxu0 %v665
  %724 = vmatprep.subr.mxu0 0.0
  %725 = vmatpush2.msra.mxu0 %v664
  %726 = vmatprep.subr.mxu0 0.0
  %727 = vmatpush2.msra.mxu0 %v663
  %728 = vmatprep.subr.mxu0 0.0
  %729 = vmatpush2.msra.mxu0 %v662
  %730 = vmatprep.subr.mxu0 0.0
  %731 = vmatpush2.msra.mxu0 %v661
  %732 = vmatprep.subr.mxu0 0.0
  %733 = vmatpush2.msra.mxu0 %v660
  %734 = vmatprep.subr.mxu0 0.0
  %735 = vmatpush2.msra.mxu0 %v659
  %736 = vmatprep.subr.mxu0 0.0
  %737 = vmatpush2.msra.mxu0 %v658
  %738 = vmatprep.mubr.f32.mxu0 %v641
  %739 = vmatmul.mubr.f32.gmra.mxu0 %v639
  %v740 = vpop.f32.mrf.mxu0
  %v741 = vadd.f32 0.0, %v740
  %v742 = vpop.f32.mrf.mxu0
  %743 = vdwg.mxu0
  %v744 = vld [vmem:[#allocation3] sm:$0x1]
  %v746 = vlaneseq
  %v747 = vshrl.u32 %v746, 7
  %v748 = vsub.s32 0, %v747
  %v749 = vrot.slane %v744, %v748
  %750 = vrot.lane.b32.xlu0 %v749, 16
  %v751 = vpop.permute.xlu0 %750
  %v753 = vadd.f32 %v741, %v751
  %v754 = vmul.f32 %v741, %v741
  %756 = vrot.lane.b32.xlu0 %v741, 120
  %v757 = vpop.permute.xlu0 %756
  %v759 = vsub.f32 %v754, %v757
  %vm760 = vcmask 64512
  %v761 = vsel %vm760, %v759, 0.0
  %762 = vadd.xlane.f32.xlu0 %v761
  %v763 = vpop.xlane.xlu0 %762
  %v764 = vmul.f32 %v763, 0.5
  %v765 = vadd.f32 %v753, %v764
  %767 = vset.pattern.permute.xlu0 16
  %768 = vperm.xlu0 %767, %v765
  %v769 = vpop.permute.xlu0 %768
  %771 = vst [vmem:[%s8] sm:$0xff] %v769
  // Predicated region
  $region34: #{target_net_forward.1} parent=0 // pred_check
    _
  $region35: #{target_net_forward.1} parent=0 // pred_check_branch
    %773 = sbr.rel (0) target = $region37
  $region36: #{target_net_forward.1} parent=0 // pred_region
    _
  $region37: #{target_net_forward.1} parent=0 // pred_fallthru
    _
  // Predicated region
  $region38: #{target_net_forward.1} parent=0 // pred_check
    _
  $region39: #{target_net_forward.1} parent=0 // pred_check_branch
    %775 = sbr.rel (0) target = $region41
  $region40: #{target_net_forward.1} parent=0 // pred_region
    _
  $region41: #{target_net_forward.1} parent=0 // pred_fallthru
    _
  // Predicated region
  $region42: #{target_net_forward.1} parent=0 // pred_check
    _
  $region43: #{target_net_forward.1} parent=0 // pred_check_branch
    %777 = sbr.rel (0) target = $region45
  $region44: #{target_net_forward.1} parent=0 // pred_region
    _
  $region45: #{target_net_forward.1} parent=0 // pred_fallthru
    _
  // Predicated region
  $region46: #{target_net_forward.1} parent=0 // pred_check
    _
  $region47: #{target_net_forward.1} parent=0 // pred_check_branch
    %779 = sbr.rel (0) target = $region49
  $region48: #{target_net_forward.1} parent=0 // pred_region
    _
  $region49: #{target_net_forward.1} parent=0 // pred_fallthru
    _

</llo_original>
